<compile_context>
chip_gen: v6e
topology: v6e:2x2x1
jax: 0.10.0
libtpu: 0.0.40
codegen_flags: <defaults>
</compile_context>

<pallas_src>
import functools

import jax
import jax.numpy as jnp
import numpy as np
from jax import lax
from jax.experimental import pallas as pl
from jax.experimental.pallas import tpu as pltpu


def _conv_bn_relu6_kernel(x_ref, w_ref, bias_ref, o_ref):
    """One (batch, row-tile) grid step: a single MXU matmul + f32 epilogue.

    x_ref:    (1, H_blk, KH*W*Cin)       bf16  row-im2col'd input
    w_ref:    (KH*W*Cin, Wout*Cout)      bf16  banded weights (BN scale folded in)
    bias_ref: (1, Wout*Cout)             f32   BN bias tiled along Wout
    o_ref:    (1, H_blk, Wout*Cout)      output dtype
    """
    acc = jnp.dot(x_ref[0], w_ref[...], preferred_element_type=jnp.float32)
    y = jnp.clip(acc + bias_ref[0], 0.0, 6.0)
    o_ref[0] = y.astype(o_ref.dtype)


def _build_banded_weights(w_khkwcico, W, Wout, pad):
    """band[kh*W*Cin + wi*Cin + ci, wo*Cout + co] = w[kh, kw, ci, co], wi = wo + kw - pad.

    Out-of-range wi (the W-direction zero padding) simply contributes no entry, so the
    W padding never has to be materialized on the input side.
    """
    KH, KW, Cin, Cout = w_khkwcico.shape
    wo = jnp.arange(Wout)
    wi_all = jnp.arange(W)
    bands = []
    for kh in range(KH):
        acc = jnp.zeros((W, Cin, Wout, Cout), w_khkwcico.dtype)
        for kw in range(KW):
            wi = wo + kw - pad                                   # (Wout,)
            sel = (wi_all[:, None] == wi[None, :])               # (W, Wout); OOB never matches
            acc = acc + (sel.astype(w_khkwcico.dtype)[:, None, :, None]
                         * w_khkwcico[kh, kw][None, :, None, :])
        bands.append(acc.reshape(W * Cin, Wout * Cout))
    return jnp.concatenate(bands, axis=0)                        # (KH*W*Cin, Wout*Cout)


def _pick_row_tiles(hout, n):
    """Largest row blocks that still leave >= 2 'parallel' grid steps (v7x: 2 TensorCores)."""
    if n >= 2:
        return 1, hout                       # grid (N, 1): N parallel steps already
    if hout % 2 == 0:
        return 2, hout // 2                  # N == 1: keep two row tiles
    return 1, hout


@functools.partial(jax.jit, static_argnames=("stride", "padding"))
def conv2d_batch_relu6(x_nchw, w_oihw, bn_gamma, bn_beta, bn_mean, bn_var,
                       *, stride=1, padding=1, eps=1e-5):
    """Conv2d(kernel k, stride=1, padding) + BatchNorm2d(eval) + ReLU6.

    x_nchw: (N, Cin, H, W), w_oihw: (Cout, Cin, KH, KW) -> (N, Cout, Hout, Wout).
    """
    if stride != 1:
        # TODO(synk): stride > 1 requires strided row/column selection in the band.
        raise NotImplementedError("Pallas Conv2dBatchRelu6 supports stride=1 only.")

    N, Cin, H, W = x_nchw.shape
    Cout, Cin_w, KH, KW = w_oihw.shape
    assert Cin_w == Cin
    Hout = H + 2 * padding - KH + 1
    Wout = W + 2 * padding - KW + 1
    assert Hout > 0 and Wout > 0

    T, H_blk = _pick_row_tiles(Hout, N)
    K_total = KH * W * Cin
    WC = Wout * Cout

    # ---- fold BatchNorm (eval) into weights / bias ----
    scale = bn_gamma / jnp.sqrt(bn_var + eps)                        # (Cout,)
    bias = bn_beta - bn_mean * scale                                 # (Cout,)
    w_folded = w_oihw * scale[:, None, None, None]                   # OIHW, BN scale folded
    w_k = jnp.transpose(w_folded, (2, 3, 1, 0))                      # (KH, KW, Cin, Cout)
    band = _build_banded_weights(w_k, W, Wout, padding).astype(jnp.bfloat16)  # (K_total, WC)
    bias_t = jnp.tile(bias, Wout).reshape(1, WC).astype(jnp.float32)

    # ---- input: NHWC, pad H only (W padding lives in the band), flatten (W,Cin) to lanes,
    #      row-im2col over kh so the kernel is one deep-K matmul with no shifted slices ----
    # TODO(synk): accept NHWC at the API boundary to drop this transpose.
    x = jnp.transpose(x_nchw, (0, 2, 3, 1))                          # (N, H, W, Cin)
    x = jnp.pad(x, ((0, 0), (padding, padding), (0, 0), (0, 0)))     # (N, Hp, W, Cin)
    Hp = H + 2 * padding
    x = x.reshape(N, Hp, W * Cin)                                    # free reshape
    # (N, Hout, KH, W*Cin): row ho gets rows ho..ho+KH-1 of the padded input.
    x_rows = jnp.stack([x[:, kh:kh + Hout, :] for kh in range(KH)], axis=2)
    x_lhs = x_rows.reshape(N, Hout, K_total).astype(jnp.bfloat16)    # (N, Hout, KH*W*Cin)

    # ---- VMEM guard (double-buffered blocks must fit the scoped limit) ----
    vmem_limit = 32 * 1024 * 1024
    out_bytes = jnp.dtype(x_nchw.dtype).itemsize
    blk_bytes = 2 * (H_blk * K_total * 2        # x block (bf16)
                     + K_total * WC * 2         # band   (bf16)
                     + WC * 4                   # bias   (f32)
                     + H_blk * WC * out_bytes)  # output block
    assert blk_bytes < vmem_limit, (
        f"Conv2dBatchRelu6 blocks ({blk_bytes} B) exceed VMEM limit ({vmem_limit} B); "
        "tile Wout*Cout / single-buffer the band before scaling up.")

    out = pl.pallas_call(
        _conv_bn_relu6_kernel,
        out_shape=jax.ShapeDtypeStruct((N, Hout, WC), x_nchw.dtype),
        grid_spec=pltpu.PrefetchScalarGridSpec(
            num_scalar_prefetch=0,
            grid=(N, T),
            in_specs=[
                pl.BlockSpec((1, H_blk, K_total), lambda n, t: (n, t, 0)),
                pl.BlockSpec((K_total, WC), lambda n, t: (0, 0)),
                pl.BlockSpec((1, WC), lambda n, t: (0, 0)),
            ],
            out_specs=pl.BlockSpec((1, H_blk, WC), lambda n, t: (n, t, 0)),
        ),
        compiler_params=pltpu.CompilerParams(
            dimension_semantics=("parallel", "parallel"),
            vmem_limit_bytes=vmem_limit,     # fits v7x (64 MiB VMEM) with headroom
        ),
    )(x_lhs, band, bias_t)

    out = out.reshape(N, Hout, Wout, Cout)                           # free reshape (un-flatten lanes)
    return jnp.transpose(out, (0, 3, 1, 2))                          # back to NCHW


def _reference(x, w, gamma, beta, mean, var, padding=1, eps=1e-5):
    """Reference matching the kernel numerics (BN scale folded, bf16-rounded MXU inputs)."""
    scale = gamma / jnp.sqrt(var + eps)
    bias = beta - mean * scale
    w_f = (w * scale[:, None, None, None]).astype(jnp.bfloat16).astype(jnp.float32)
    xb = x.astype(jnp.bfloat16).astype(jnp.float32)
    y = lax.conv_general_dilated(
        xb, w_f, window_strides=(1, 1),
        padding=[(padding, padding), (padding, padding)],
        dimension_numbers=("NCHW", "OIHW", "NCHW"),
        precision=lax.Precision.HIGHEST)
    return jnp.clip(y + bias.reshape(1, -1, 1, 1), 0.0, 6.0)


if __name__ == "__main__":
    # Module config: Conv2dBatchRelu6(in_channels=4, out_channels=8)  (k=3, s=1, p=1)
    N, Cin, Cout, H, W = 2, 4, 8, 16, 16
    KH = KW = 3

    key = jax.random.PRNGKey(0)
    kx, kw, kg, kb, km, kv = jax.random.split(key, 6)

    x = jax.random.normal(kx, (N, Cin, H, W), jnp.float32)
    w = jax.random.normal(kw, (Cout, Cin, KH, KW), jnp.float32) * 0.1
    # Deterministic BatchNorm parameters / running stats (eval-mode BN).
    gamma = 1.0 + 0.1 * jax.random.normal(kg, (Cout,), jnp.float32)
    beta = 0.1 * jax.random.normal(kb, (Cout,), jnp.float32)
    run_mean = 0.05 * jax.random.normal(km, (Cout,), jnp.float32)
    run_var = 1.0 + 0.1 * jax.random.uniform(kv, (Cout,), jnp.float32)

    out = conv2d_batch_relu6(x, w, gamma, beta, run_mean, run_var, padding=1)
    out = jax.block_until_ready(out)

    ref = _reference(x, w, gamma, beta, run_mean, run_var, padding=1)
    np.testing.assert_allclose(np.asarray(out), np.asarray(ref), rtol=1e-3, atol=1e-3)

    print("KERNEL_OK")
</pallas_src>

<mosaic_0001>
module attributes {stable_mosaic.version = 11 : i64} {
  func.func @_conv_bn_relu6_kernel(%arg0: i32, %arg1: i32, %arg2: memref<1x16x192xbf16, #tpu.memory_space<vmem>>, %arg3: memref<192x128xbf16, #tpu.memory_space<vmem>>, %arg4: memref<1x128xf32, #tpu.memory_space<vmem>>, %arg5: memref<1x16x128xf32, #tpu.memory_space<vmem>>) attributes {dimension_semantics = [#tpu.dimension_semantics<parallel>, #tpu.dimension_semantics<parallel>], iteration_bounds = array<i64: 2, 1>, scalar_prefetch = 0 : i64, scratch_operands = 0 : i64, tpu.core_type = #tpu.core_type<tc>, window_params = [{transform_indices = @transform_0, window_bounds = array<i64: 1, 16, 192>}, {pipeline_mode = #tpu.pipeline_mode<synchronous>, transform_indices = @transform_1, window_bounds = array<i64: 192, 128>}, {pipeline_mode = #tpu.pipeline_mode<synchronous>, transform_indices = @transform_2, window_bounds = array<i64: 1, 128>}, {transform_indices = @transform_3, window_bounds = array<i64: 1, 16, 128>}]} {
    %c0 = arith.constant 0 : index
    %c0_0 = arith.constant 0 : index
    %c0_1 = arith.constant 0 : index
    %0 = vector.load %arg2[%c0, %c0_0, %c0_1] : memref<1x16x192xbf16, #tpu.memory_space<vmem>>, vector<1x16x192xbf16>
    %1 = vector.shape_cast %0 : vector<1x16x192xbf16> to vector<16x192xbf16>
    %c0_2 = arith.constant 0 : index
    %c0_3 = arith.constant 0 : index
    %2 = vector.load %arg3[%c0_2, %c0_3] : memref<192x128xbf16, #tpu.memory_space<vmem>>, vector<192x128xbf16>
    %cst = arith.constant dense<0.000000e+00> : vector<16x128xf32>
    %3 = tpu.matmul %1, %2, %cst {dimension_numbers = #tpu.dot_dimension_numbers<[1], [0], [0], [1], [0, 0, 1, 1], [], []>} : vector<16x192xbf16>, vector<192x128xbf16>, vector<16x128xf32> -> vector<16x128xf32>
    %c0_4 = arith.constant 0 : index
    %c0_5 = arith.constant 0 : index
    %4 = vector.load %arg4[%c0_4, %c0_5] : memref<1x128xf32, #tpu.memory_space<vmem>>, vector<1x128xf32>
    %5 = vector.shape_cast %4 : vector<1x128xf32> to vector<128xf32>
    %6 = vector.shape_cast %5 : vector<128xf32> to vector<1x128xf32>
    %7 = vector.broadcast %6 : vector<1x128xf32> to vector<16x128xf32>
    %8 = arith.addf %3, %7 : vector<16x128xf32>
    %cst_6 = arith.constant 0.000000e+00 : f32
    %cst_7 = arith.constant 6.000000e+00 : f32
    %9 = vector.broadcast %cst_6 : f32 to vector<16x128xf32>
    %10 = arith.maximumf %9, %8 : vector<16x128xf32>
    %11 = vector.broadcast %cst_7 : f32 to vector<16x128xf32>
    %12 = arith.minimumf %11, %10 : vector<16x128xf32>
    %c0_8 = arith.constant 0 : index
    %c0_9 = arith.constant 0 : index
    %c0_10 = arith.constant 0 : index
    %13 = vector.load %arg5[%c0_8, %c0_9, %c0_10] : memref<1x16x128xf32, #tpu.memory_space<vmem>>, vector<1x16x128xf32>
    %14 = vector.shape_cast %13 : vector<1x16x128xf32> to vector<16x128xf32>
    %15 = vector.shape_cast %12 : vector<16x128xf32> to vector<1x16x128xf32>
    tpu.vector_store %arg5[%c0_8, %c0_9, %c0_10], %15 {strides = array<i32>} : memref<1x16x128xf32, #tpu.memory_space<vmem>>, vector<1x16x128xf32>,
    return
  }
  func.func @transform_0(%arg0: i32, %arg1: i32) -> (i32, i32, i32) {
    %c0_i32 = arith.constant 0 : i32
    %c0_i32_0 = arith.constant 0 : i32
    return %arg0, %arg1, %c0_i32 : i32, i32, i32
  }
  func.func @transform_1(%arg0: i32, %arg1: i32) -> (i32, i32) {
    %c0_i32 = arith.constant 0 : i32
    %c0_i32_0 = arith.constant 0 : i32
    %c0_i32_1 = arith.constant 0 : i32
    return %c0_i32, %c0_i32_0 : i32, i32
  }
  func.func @transform_2(%arg0: i32, %arg1: i32) -> (i32, i32) {
    %c0_i32 = arith.constant 0 : i32
    %c0_i32_0 = arith.constant 0 : i32
    %c0_i32_1 = arith.constant 0 : i32
    return %c0_i32, %c0_i32_0 : i32, i32
  }
  func.func @transform_3(%arg0: i32, %arg1: i32) -> (i32, i32, i32) {
    %c0_i32 = arith.constant 0 : i32
    %c0_i32_0 = arith.constant 0 : i32
    return %arg0, %arg1, %c0_i32 : i32, i32, i32
  }
}

</mosaic_0001>

<llo_original>
// kernel: tile.8
$region0: #{tile.8}
  #allocation0 [shape = 's32[1]{0}', space=sflag, size = 0x4, scoped, tag = 'scoped memory for tile.8']
  %s0 = inlined_call_operand.vmem [shape: f32[8], index: 0, kind: input, shape index: {}]
  %s1 = inlined_call_operand.vmem [shape: f32[16,8], index: 1, kind: output, shape index: {}]
  // Predicated region
  $region2: #{tile.8} parent=0 // pred_check
    _
  $region3: #{tile.8} parent=0 // pred_check_branch
    %3 = sbr.rel (0) target = $region5
  $region4: #{tile.8} parent=0 // pred_region
    _
  $region5: #{tile.8} parent=0 // pred_fallthru
    _
  %v4 = vld [vmem:[%s0] ss:$0 sm:$0xff]
  %5 = vst [vmem:[%s1] sm:$0xff] %v4
  %s6 = scalar_lea.vmem %s1, 8
  %7 = vst [vmem:[%s6] sm:$0xff] %v4

// kernel: tile.9
$region0: #{tile.9}
  %s0 = inlined_call_operand.vmem [shape: f32[16,8], index: 0, kind: input, shape index: {}]
  %s1 = inlined_call_operand.vmem [shape: f32[1,128], index: 1, kind: output, shape index: {}]
  $region1: #{tile.9} parent=0
    #allocation0 [shape = 'u8[4096]{0}', space=vmem, size = 0x1000, scoped, tag = 'scoped mem for output reshape']
    %v2 = vld [vmem:[%s0] sm:$0x1]
    %vm3 = vcmask 64512
    %4 = vst.msk [vmem:[#allocation0] sm:$0x1] %vm3, %v2
    %s5 = scalar_lea.vmem %s0, 15
    %v6 = vld [vmem:[%s5] sm:$0x1]
    %7 = vrot.lane.b32.xlu0 %v6, 120
    %v8 = vpop.permute.xlu0 %7
    %vm9 = vcmask 1048512
    %10 = vst.msk [vmem:[#allocation0] sm:$0x1] %vm9, %v8
    %s11 = scalar_lea.vmem %s0, 14
    %v12 = vld [vmem:[%s11] sm:$0x1]
    %13 = vrot.lane.b32.xlu0 %v12, 112
    %v14 = vpop.permute.xlu0 %13
    %vm15 = vcmask 982912
    %16 = vst.msk [vmem:[#allocation0] sm:$0x1] %vm15, %v14
    %s17 = scalar_lea.vmem %s0, 13
    %v18 = vld [vmem:[%s17] sm:$0x1]
    %19 = vrot.lane.b32.xlu0 %v18, 104
    %v20 = vpop.permute.xlu0 %19
    %vm21 = vcmask 917312
    %22 = vst.msk [vmem:[#allocation0] sm:$0x1] %vm21, %v20
    %s23 = scalar_lea.vmem %s0, 12
    %v24 = vld [vmem:[%s23] sm:$0x1]
    %25 = vrot.lane.b32.xlu0 %v24, 96
    %v26 = vpop.permute.xlu0 %25
    %vm27 = vcmask 851712
    %28 = vst.msk [vmem:[#allocation0] sm:$0x1] %vm27, %v26
    %s29 = scalar_lea.vmem %s0, 11
    %v30 = vld [vmem:[%s29] sm:$0x1]
    %31 = vrot.lane.b32.xlu0 %v30, 88
    %v32 = vpop.permute.xlu0 %31
    %vm33 = vcmask 786112
    %34 = vst.msk [vmem:[#allocation0] sm:$0x1] %vm33, %v32
    %s35 = scalar_lea.vmem %s0, 10
    %v36 = vld [vmem:[%s35] sm:$0x1]
    %37 = vrot.lane.b32.xlu0 %v36, 80
    %v38 = vpop.permute.xlu0 %37
    %vm39 = vcmask 720512
    %40 = vst.msk [vmem:[#allocation0] sm:$0x1] %vm39, %v38
    %s41 = scalar_lea.vmem %s0, 9
    %v42 = vld [vmem:[%s41] sm:$0x1]
    %43 = vrot.lane.b32.xlu0 %v42, 72
    %v44 = vpop.permute.xlu0 %43
    %vm45 = vcmask 654912
    %46 = vst.msk [vmem:[#allocation0] sm:$0x1] %vm45, %v44
    %s47 = scalar_lea.vmem %s0, 8
    %v48 = vld [vmem:[%s47] sm:$0x1]
    %49 = vrot.lane.b32.xlu0 %v48, 64
    %v50 = vpop.permute.xlu0 %49
    %vm51 = vcmask 589312
    %52 = vst.msk [vmem:[#allocation0] sm:$0x1] %vm51, %v50
    %s53 = scalar_lea.vmem %s0, 7
    %v54 = vld [vmem:[%s53] sm:$0x1]
    %55 = vrot.lane.b32.xlu0 %v54, 56
    %v56 = vpop.permute.xlu0 %55
    %vm57 = vcmask 523712
    %58 = vst.msk [vmem:[#allocation0] sm:$0x1] %vm57, %v56
    %s59 = scalar_lea.vmem %s0, 6
    %v60 = vld [vmem:[%s59] sm:$0x1]
    %61 = vrot.lane.b32.xlu0 %v60, 48
    %v62 = vpop.permute.xlu0 %61
    %vm63 = vcmask 458112
    %64 = vst.msk [vmem:[#allocation0] sm:$0x1] %vm63, %v62
    %s65 = scalar_lea.vmem %s0, 5
    %v66 = vld [vmem:[%s65] sm:$0x1]
    %67 = vrot.lane.b32.xlu0 %v66, 40
    %v68 = vpop.permute.xlu0 %67
    %vm69 = vcmask 392512
    %70 = vst.msk [vmem:[#allocation0] sm:$0x1] %vm69, %v68
    %s71 = scalar_lea.vmem %s0, 4
    %v72 = vld [vmem:[%s71] sm:$0x1]
    %73 = vrot.lane.b32.xlu0 %v72, 32
    %v74 = vpop.permute.xlu0 %73
    %vm75 = vcmask 326912
    %76 = vst.msk [vmem:[#allocation0] sm:$0x1] %vm75, %v74
    %s77 = scalar_lea.vmem %s0, 3
    %v78 = vld [vmem:[%s77] sm:$0x1]
    %79 = vrot.lane.b32.xlu0 %v78, 24
    %v80 = vpop.permute.xlu0 %79
    %vm81 = vcmask 261312
    %82 = vst.msk [vmem:[#allocation0] sm:$0x1] %vm81, %v80
    %s83 = scalar_lea.vmem %s0, 2
    %v84 = vld [vmem:[%s83] sm:$0x1]
    %85 = vrot.lane.b32.xlu0 %v84, 16
    %v86 = vpop.permute.xlu0 %85
    %vm87 = vcmask 195712
    %88 = vst.msk [vmem:[#allocation0] sm:$0x1] %vm87, %v86
    %s89 = scalar_lea.vmem %s0, 1
    %v90 = vld [vmem:[%s89] sm:$0x1]
    %91 = vrot.lane.b32.xlu0 %v90, 8
    %v92 = vpop.permute.xlu0 %91
    %vm93 = vcmask 130112
    %94 = vst.msk [vmem:[#allocation0] sm:$0x1] %vm93, %v92
    %s96 = sshll.u32 1, 1
    %s97 = ssub.s32 %s96, 1
    %v99 = vld [vmem:[#allocation0] sm:%s97]
    %s100 = sshll.u32 1, 1
    %s101 = ssub.s32 %s100, 1
    %102 = vst [vmem:[%s1] sm:%s101] %v99

// kernel: conv2d_batch_relu6.1
$region0: #{conv2d_batch_relu6.1}
  #allocation0 [shape = 'u32[]', space=smem, size = 0x4, offset = 0x4, fixed_abs, tag = 'smem constant byte address 0x4 - core index']
  #allocation1 [shape = 'u32[144,128]{1,0:T(1,128)}', space=vmem, size = 0x12000, scoped, tag = 'internal scratch']
  %s0 = inlined_call_operand.vmem [shape: bf16[2,16,192], index: 0, kind: input, shape index: {}]
  %s1 = inlined_call_operand.vmem [shape: bf16[192,128], index: 1, kind: input, shape index: {}]
  %s2 = inlined_call_operand.vmem [shape: f32[1,128], index: 2, kind: input, shape index: {}]
  %s3 = inlined_call_operand.vmem [shape: f32[2,16,128], index: 3, kind: output, shape index: {}]
  %s4 = sld [smem:[#allocation0]]
  $region45: #{conv2d_batch_relu6.1} parent=0
    _
  %s6 = ssub.s32 1, %s4
  %s7 = scalar_select 0, %s6, %s4
  loop: start=0, step=1, limit=4
  $region2: #{conv2d_batch_relu6.1} parent=0 // loop_pre_header
    _
  $region3: #{conv2d_batch_relu6.1} parent=0 // loop_header
    %s9 = sphi 0, %s13
    %p10 = scmp.ge.s32.totalorder %s9, 4
    %s16 = sphi 0, %s28
    %s17 = sphi 0, %s24
    %s18 = sphi 0, %s16
    %s19 = sphi 0, %s17
    %s20 = sphi 0, %s18
    %s21 = sphi 0, %s19
    %s33 = sphi 0, %s35
    %s36 = sphi 0, %s33
    %s37 = sphi 0, %s36
    %s53 = sphi 0, %s37
    %s57 = sphi 0, %s57
    %s59 = sphi 0, %s57
    %s60 = sphi 0, %s59
    %s74 = sphi 0, %s60
    %s78 = sphi 0, %s78
    %s80 = sphi 0, %s78
    %s81 = sphi 0, %s80
    %s95 = sphi 0, %s81
    %s103 = sphi 0, %s105
    %s106 = sphi 0, %s103
    %s107 = sphi 0, %s106
    %s123 = sphi 0, %s107
  $region4: #{conv2d_batch_relu6.1} parent=0 // loop_header_branch
    %12 = sbr.rel (%p10) target = $region8
  $region5: #{conv2d_batch_relu6.1} parent=0 // loop_body
    %s14 = ssub.s32 %s9, 1
    %s15 = ssub.s32 %s9, 2
    %s22 = sadd.s32 1, %s17
    %p23 = scmp.ge.s32.totalorder %s22, 1
    %s24 = scalar_select %p23, 0, %s22
    %s25 = sadd.s32 1, %s16
    %s26 = scalar_select %p23, %s25, %s16
    %p27 = scmp.ge.s32.totalorder %s26, 2
    %s28 = scalar_select %p27, 0, %s26
    %s29 = ssub.s32 %s16, %s28
    %s30 = ssub.s32 %s17, %s24
    %s31 = sor.u32 %s29, %s30
    %p32 = scmp.eq.s32.totalorder %s31, 0
    %s34 = sadd.s32 %s33, 1
    %s35 = scalar_select %p32, %s33, %s34
    %p38 = pneg %p32
    %p39 = scmp.eq.s32.totalorder %s9, 1
    %p40 = por %p38, %p39
    %p41 = scmp.ne.s32.totalorder %s33, %s36
    %p42 = scmp.eq.s32.totalorder %s9, 0
    %p43 = por %p41, %p42
    %p44 = scmp.ne.s32.totalorder %s33, %s36
    %p45 = scmp.eq.s32.totalorder %s14, 1
    %p46 = por %p44, %p45
    %p47 = scmp.ne.s32.totalorder %s36, %s37
    %p48 = scmp.eq.s32.totalorder %s14, 0
    %p49 = por %p47, %p48
    %p50 = scmp.ne.s32.totalorder %s36, %s37
    %p51 = scmp.eq.s32.totalorder %s15, 1
    %p52 = por %p50, %p51
    %p54 = scmp.ne.s32.totalorder %s37, %s53
    %p55 = scmp.eq.s32.totalorder %s15, 0
    %p56 = por %p54, %p55
    %s58 = sadd.s32 %s57, 1
    %p61 = scmp.eq.s32.totalorder %s9, 1
    %p62 = scmp.ne.s32.totalorder %s57, %s59
    %p63 = scmp.eq.s32.totalorder %s9, 0
    %p64 = por %p62, %p63
    %p65 = scmp.ne.s32.totalorder %s57, %s59
    %p66 = scmp.eq.s32.totalorder %s14, 1
    %p67 = por %p65, %p66
    %p68 = scmp.ne.s32.totalorder %s59, %s60
    %p69 = scmp.eq.s32.totalorder %s14, 0
    %p70 = por %p68, %p69
    %p71 = scmp.ne.s32.totalorder %s59, %s60
    %p72 = scmp.eq.s32.totalorder %s15, 1
    %p73 = por %p71, %p72
    %p75 = scmp.ne.s32.totalorder %s60, %s74
    %p76 = scmp.eq.s32.totalorder %s15, 0
    %p77 = por %p75, %p76
    %s79 = sadd.s32 %s78, 1
    %p82 = scmp.eq.s32.totalorder %s9, 1
    %p83 = scmp.ne.s32.totalorder %s78, %s80
    %p84 = scmp.eq.s32.totalorder %s9, 0
    %p85 = por %p83, %p84
    %p86 = scmp.ne.s32.totalorder %s78, %s80
    %p87 = scmp.eq.s32.totalorder %s14, 1
    %p88 = por %p86, %p87
    %p89 = scmp.ne.s32.totalorder %s80, %s81
    %p90 = scmp.eq.s32.totalorder %s14, 0
    %p91 = por %p89, %p90
    %p92 = scmp.ne.s32.totalorder %s80, %s81
    %p93 = scmp.eq.s32.totalorder %s15, 1
    %p94 = por %p92, %p93
    %p96 = scmp.ne.s32.totalorder %s81, %s95
    %p97 = scmp.eq.s32.totalorder %s15, 0
    %p98 = por %p96, %p97
    %s99 = ssub.s32 %s16, %s28
    %s100 = ssub.s32 %s17, %s24
    %s101 = sor.u32 %s99, %s100
    %p102 = scmp.eq.s32.totalorder %s101, 0
    %s104 = sadd.s32 %s103, 1
    %s105 = scalar_select %p102, %s103, %s104
    %p108 = pneg %p102
    %p109 = scmp.eq.s32.totalorder %s9, 1
    %p110 = por %p108, %p109
    %p111 = scmp.ne.s32.totalorder %s103, %s106
    %p112 = scmp.eq.s32.totalorder %s9, 0
    %p113 = por %p111, %p112
    %p114 = scmp.ne.s32.totalorder %s103, %s106
    %p115 = scmp.eq.s32.totalorder %s14, 1
    %p116 = por %p114, %p115
    %p117 = scmp.ne.s32.totalorder %s106, %s107
    %p118 = scmp.eq.s32.totalorder %s14, 0
    %p119 = por %p117, %p118
    %p120 = scmp.ne.s32.totalorder %s106, %s107
    %p121 = scmp.eq.s32.totalorder %s15, 1
    %p122 = por %p120, %p121
    %p124 = scmp.ne.s32.totalorder %s107, %s123
    %p125 = scmp.eq.s32.totalorder %s15, 0
    %p126 = por %p124, %p125
    %p127 = scmp.le.s32.totalorder 1, %s9
    %p128 = scmp.lt.s32.totalorder %s9, 3
    %p129 = pnand %p127, %p128
    %p130 = pneg %p129
    // Predicated region
    $region9: #{conv2d_batch_relu6.1} parent=5 // pred_check
      _
    $region10: #{conv2d_batch_relu6.1} parent=5 // pred_check_branch
      %132 = sbr.rel (%p129) target = $region12
    $region11: #{conv2d_batch_relu6.1} parent=5 // pred_region
      %s133 = ssub.s32 %s9, 1
      // Predicated region
      $region13: #{conv2d_batch_relu6.1} parent=11 // pred_check
        %p134 = pneg %p70
      $region14: #{conv2d_batch_relu6.1} parent=11 // pred_check_branch
        %136 = sbr.rel (%p134) target = $region16
      $region15: #{conv2d_batch_relu6.1} parent=11 // pred_region
        _
      $region16: #{conv2d_batch_relu6.1} parent=11 // pred_fallthru
        _
      // Predicated region
      $region17: #{conv2d_batch_relu6.1} parent=11 // pred_check
        %p137 = pneg %p91
      $region18: #{conv2d_batch_relu6.1} parent=11 // pred_check_branch
        %139 = sbr.rel (%p137) target = $region20
      $region19: #{conv2d_batch_relu6.1} parent=11 // pred_region
        _
      $region20: #{conv2d_batch_relu6.1} parent=11 // pred_fallthru
        _
    $region12: #{conv2d_batch_relu6.1} parent=5 // pred_fallthru
      _
    %p140 = scmp.lt.s32.totalorder %s9, 2
    // Predicated region
    $region21: #{conv2d_batch_relu6.1} parent=5 // pred_check
      %p141 = pneg %p140
    $region22: #{conv2d_batch_relu6.1} parent=5 // pred_check_branch
      %143 = sbr.rel (%p141) target = $region24
    $region23: #{conv2d_batch_relu6.1} parent=5 // pred_region
      // Predicated region
      $region25: #{conv2d_batch_relu6.1} parent=23 // pred_check
        %p144 = pneg %p43
      $region26: #{conv2d_batch_relu6.1} parent=23 // pred_check_branch
        %146 = sbr.rel (%p144) target = $region28
      $region27: #{conv2d_batch_relu6.1} parent=23 // pred_region
        %s147 = smul.u32 2, %s17
        %p148 = scmp.lt.s32.totalorder %s16, 1
        %s149 = scalar_select %p148, %s16, 1
        %p150 = scmp.lt.s32.totalorder %s147, 1
        %s151 = scalar_select %p150, %s147, 1
        %s152 = smul.addr %s151, 2
        %s153 = smul.addr %s149, 4
        %s154 = sadd.s32 %s152, %s153
        %s155 = smul.addr %s154, 4
        %s156 = scalar_lea.vmem %s0, %s155
        %s157 = smul.u32 2, %s17
      $region28: #{conv2d_batch_relu6.1} parent=23 // pred_fallthru
        _
    $region24: #{conv2d_batch_relu6.1} parent=5 // pred_fallthru
      _
    %p158 = scmp.le.s32.totalorder 1, %s9
    %p159 = scmp.lt.s32.totalorder %s9, 3
    %p160 = pnand %p158, %p159
    %p161 = pneg %p160
    // Predicated region
    $region29: #{conv2d_batch_relu6.1} parent=5 // pred_check
      _
    $region30: #{conv2d_batch_relu6.1} parent=5 // pred_check_branch
      %163 = sbr.rel (%p160) target = $region32
    $region31: #{conv2d_batch_relu6.1} parent=5 // pred_region
      %s164 = ssub.s32 %s9, 1
      %s165 = smul.u32 2, %s19
      %p166 = scmp.lt.s32.totalorder %s18, 1
      %s167 = scalar_select %p166, %s18, 1
      %p168 = scmp.lt.s32.totalorder %s165, 1
      %s169 = scalar_select %p168, %s165, 1
      %s170 = smul.addr %s169, 2
      %s171 = smul.addr %s167, 4
      %s172 = sadd.s32 %s170, %s171
      %s173 = smul.addr %s172, 4
      %s174 = scalar_lea.vmem %s0, %s173
      %p175 = pneg %p49
      %p176 = pneg %p46
      %p177 = pneg %p70
      %p178 = pneg %p67
      %p179 = pneg %p91
      %p180 = pneg %p88
      %p181 = pneg %p119
      %p182 = pneg %p116
      %s183 = smul.u32 2, %s19
      %p184 = scmp.lt.s32.totalorder %s18, 1
      %s185 = scalar_select %p184, %s18, 1
      %p186 = scmp.lt.s32.totalorder %s183, 1
      %s187 = scalar_select %p186, %s183, 1
      %s188 = smul.addr %s185, 2
      %s189 = sadd.s32 %s187, %s188
      %s190 = smul.addr %s189, 8
      %s191 = scalar_lea.vmem %s3, %s190
      %s192 = smul.u32 2, %s19
      %p193 = scmp.lt.s32.totalorder %s18, 1
      %s194 = scalar_select %p193, %s18, 1
      %p195 = scmp.lt.s32.totalorder %s192, 1
      %s196 = scalar_select %p195, %s192, 1
      %s197 = smul.addr %s196, 2
      %s198 = smul.addr %s194, 4
      %s199 = sadd.s32 %s197, %s198
      %s200 = smul.addr %s199, 4
      %s201 = scalar_lea.vmem %s0, %s200
      %s202 = smul.u32 2, %s19
      %s203 = smul.u32 2, %s19
      %p204 = scmp.lt.s32.totalorder %s18, 1
      %s205 = scalar_select %p204, %s18, 1
      %p206 = scmp.lt.s32.totalorder %s203, 1
      %s207 = scalar_select %p206, %s203, 1
      %s208 = smul.addr %s205, 2
      %s209 = sadd.s32 %s207, %s208
      %s210 = smul.addr %s209, 8
      %s211 = scalar_lea.vmem %s3, %s210
      %s212 = smul.u32 2, %s19
      %v214 = vld [vmem:[%s201] sm:$0xff]
      %v215 = vld [vmem:[%s201 + $0x8] sm:$0xff]
      %v216 = vld [vmem:[%s1] sm:$0xf]
      %v217 = vld [vmem:[%s1 + $0x4] sm:$0xf]
      %v218 = vld [vmem:[%s1 + $0x8] sm:$0xf]
      %v219 = vld [vmem:[%s1 + $0xc] sm:$0xf]
      %v220 = vld [vmem:[%s1 + $0x10] sm:$0xf]
      %v221 = vld [vmem:[%s1 + $0x14] sm:$0xf]
      %v222 = vld [vmem:[%s1 + $0x18] sm:$0xf]
      %v223 = vld [vmem:[%s1 + $0x1c] sm:$0xf]
      %v224 = vld [vmem:[%s1 + $0x20] sm:$0xf]
      %v225 = vld [vmem:[%s1 + $0x24] sm:$0xf]
      %v226 = vld [vmem:[%s1 + $0x28] sm:$0xf]
      %v227 = vld [vmem:[%s1 + $0x2c] sm:$0xf]
      %v228 = vld [vmem:[%s1 + $0x30] sm:$0xf]
      %v229 = vld [vmem:[%s1 + $0x34] sm:$0xf]
      %v230 = vld [vmem:[%s1 + $0x38] sm:$0xf]
      %v231 = vld [vmem:[%s1 + $0x3c] sm:$0xf]
      %v232 = vld [vmem:[%s1 + $0x40] sm:$0xf]
      %v233 = vld [vmem:[%s1 + $0x44] sm:$0xf]
      %v234 = vld [vmem:[%s1 + $0x48] sm:$0xf]
      %v235 = vld [vmem:[%s1 + $0x4c] sm:$0xf]
      %v236 = vld [vmem:[%s1 + $0x50] sm:$0xf]
      %v237 = vld [vmem:[%s1 + $0x54] sm:$0xf]
      %v238 = vld [vmem:[%s1 + $0x58] sm:$0xf]
      %v239 = vld [vmem:[%s1 + $0x5c] sm:$0xf]
      %v240 = vld [vmem:[%s2] sm:$0x1]
      %v242 = vlaneseq
      %v243 = vshrl.u32 %v242, 7
      %v244 = vsub.s32 0, %v243
      %v245 = vrot.slane %v240, %v244
      %v249 = vunpack.c.l.b16 %v214
      %v250 = vunpack.c.h.b16 %v214
      %v251 = vunpack.c.l.b16 %v215
      %v252 = vunpack.c.h.b16 %v215
      %v253 = vpack.c.b16 %v251, %v249
      %v254 = vpack.c.b16 %v252, %v250
      %v280 = vunpack.c.l.b16 %v216
      %v281 = vunpack.c.l.b16 %v217
      %v282 = vunpack.c.l.b16 %v218
      %v283 = vunpack.c.l.b16 %v219
      %v284 = vunpack.c.l.b16 %v220
      %v285 = vunpack.c.l.b16 %v221
      %v286 = vunpack.c.l.b16 %v222
      %v287 = vunpack.c.l.b16 %v223
      %v288 = vunpack.c.l.b16 %v224
      %v289 = vunpack.c.l.b16 %v225
      %v290 = vunpack.c.l.b16 %v226
      %v291 = vunpack.c.l.b16 %v227
      %v292 = vunpack.c.l.b16 %v228
      %v293 = vunpack.c.l.b16 %v229
      %v294 = vunpack.c.l.b16 %v230
      %v295 = vunpack.c.l.b16 %v231
      %v296 = vunpack.c.l.b16 %v232
      %v297 = vunpack.c.l.b16 %v233
      %v298 = vunpack.c.l.b16 %v234
      %v299 = vunpack.c.l.b16 %v235
      %v300 = vunpack.c.l.b16 %v236
      %v301 = vunpack.c.l.b16 %v237
      %v302 = vunpack.c.l.b16 %v238
      %v303 = vunpack.c.l.b16 %v239
      %v304 = vpack.c.b16 %v281, %v280
      %v305 = vpack.c.b16 %v283, %v282
      %v306 = vpack.c.b16 %v285, %v284
      %v307 = vpack.c.b16 %v287, %v286
      %v308 = vpack.c.b16 %v289, %v288
      %v309 = vpack.c.b16 %v291, %v290
      %v310 = vpack.c.b16 %v293, %v292
      %v311 = vpack.c.b16 %v295, %v294
      %v312 = vpack.c.b16 %v297, %v296
      %v313 = vpack.c.b16 %v299, %v298
      %v314 = vpack.c.b16 %v301, %v300
      %v315 = vpack.c.b16 %v303, %v302
      %vm328 = vcmask 523264
      %v330 = vsel %vm328, %v254, 0
      %332 = vmatprep.subr.bf16.mxu0 0
      %333 = vmatpush1.bf16.msra.mxu0 %v311
      %334 = vmatprep.subr.bf16.mxu0 0
      %335 = vmatpush1.bf16.msra.mxu0 %v310
      %336 = vmatprep.subr.bf16.mxu0 0
      %337 = vmatpush1.bf16.msra.mxu0 %v309
      %338 = vmatprep.subr.bf16.mxu0 0
      %339 = vmatpush1.bf16.msra.mxu0 %v308
      %340 = vmatprep.subr.bf16.mxu0 0
      %341 = vmatpush1.bf16.msra.mxu0 %v307
      %342 = vmatprep.subr.bf16.mxu0 0
      %343 = vmatpush1.bf16.msra.mxu0 %v306
      %344 = vmatprep.subr.bf16.mxu0 0
      %345 = vmatpush1.bf16.msra.mxu0 %v305
      %346 = vmatprep.subr.bf16.mxu0 0
      %347 = vmatpush1.bf16.msra.mxu0 %v304
      %348 = vmatprep.subr.bf16.mxu0 0
      %349 = vmatpush2.bf16.msra.mxu0 0
      %350 = vmatprep.subr.bf16.mxu0 0
      %351 = vmatpush2.bf16.msra.mxu0 0
      %352 = vmatprep.subr.bf16.mxu0 0
      %353 = vmatpush2.bf16.msra.mxu0 0
      %354 = vmatprep.subr.bf16.mxu0 0
      %355 = vmatpush2.bf16.msra.mxu0 0
      %356 = vmatprep.subr.bf16.mxu0 0
      %357 = vmatpush2.bf16.msra.mxu0 %v315
      %358 = vmatprep.subr.bf16.mxu0 0
      %359 = vmatpush2.bf16.msra.mxu0 %v314
      %360 = vmatprep.subr.bf16.mxu0 0
      %361 = vmatpush2.bf16.msra.mxu0 %v313
      %362 = vmatprep.subr.bf16.mxu0 0
      %363 = vmatpush2.bf16.msra.mxu0 %v312
      %364 = vmatprep.mubr.bf16.mxu0 %v330
      %365 = vmatmul.mubr.bf16.gmra.mxu0 %v253
      %v366 = vpop.f32.mrf.mxu0
      %v367 = vadd.f32 %v245, %v366
      %v368 = vpop.f32.mrf.mxu0
      %v369 = vpop.f32.mrf.mxu0
      %v370 = vadd.f32 %v245, %v369
      %v371 = vpop.f32.mrf.mxu0
      %372 = vdwg.mxu0
      %v373 = vmax.f32 %v367, 0.0
      %v374 = vmax.f32 %v370, 0.0
      %v375 = vmin.f32 %v373, 6.0
      %v376 = vmin.f32 %v374, 6.0
      %377 = vst [vmem:[%s211] sm:$0xff] %v375
      %378 = vst [vmem:[%s211 + $0x8] sm:$0xff] %v376
      %s379 = smul.u32 2, %s19
      %p380 = scmp.lt.s32.totalorder %s18, 1
      %s381 = scalar_select %p380, %s18, 1
      %p382 = scmp.lt.s32.totalorder %s379, 1
      %s383 = scalar_select %p382, %s379, 1
      %s384 = smul.addr %s381, 2
      %s385 = sadd.s32 %s383, %s384
      %s386 = smul.addr %s385, 8
      %s387 = scalar_lea.vmem %s3, %s386
      // Predicated region
      $region33: #{conv2d_batch_relu6.1} parent=31 // pred_check
        %p388 = pneg %p116
      $region34: #{conv2d_batch_relu6.1} parent=31 // pred_check_branch
        %390 = sbr.rel (%p388) target = $region36
      $region35: #{conv2d_batch_relu6.1} parent=31 // pred_region
        %s391 = smul.u32 2, %s19
      $region36: #{conv2d_batch_relu6.1} parent=31 // pred_fallthru
        _
    $region32: #{conv2d_batch_relu6.1} parent=5 // pred_fallthru
      _
    %p392 = scmp.le.s32.totalorder 2, %s9
    // Predicated region
    $region37: #{conv2d_batch_relu6.1} parent=5 // pred_check
      %p393 = pneg %p392
    $region38: #{conv2d_batch_relu6.1} parent=5 // pred_check_branch
      %395 = sbr.rel (%p393) target = $region40
    $region39: #{conv2d_batch_relu6.1} parent=5 // pred_region
      %s396 = ssub.s32 %s9, 2
      // Predicated region
      $region41: #{conv2d_batch_relu6.1} parent=39 // pred_check
        %p397 = pneg %p122
      $region42: #{conv2d_batch_relu6.1} parent=39 // pred_check_branch
        %399 = sbr.rel (%p397) target = $region44
      $region43: #{conv2d_batch_relu6.1} parent=39 // pred_region
        %s400 = smul.u32 2, %s21
        %p401 = scmp.lt.s32.totalorder %s20, 1
        %s402 = scalar_select %p401, %s20, 1
        %p403 = scmp.lt.s32.totalorder %s400, 1
        %s404 = scalar_select %p403, %s400, 1
        %s405 = smul.addr %s402, 2
        %s406 = sadd.s32 %s404, %s405
        %s407 = smul.addr %s406, 8
        %s408 = scalar_lea.vmem %s3, %s407
      $region44: #{conv2d_batch_relu6.1} parent=39 // pred_fallthru
        _
    $region40: #{conv2d_batch_relu6.1} parent=5 // pred_fallthru
      _
  $region6: #{conv2d_batch_relu6.1} parent=0 // loop_footer
    %s13 = sadd.s32 1, %s9
  $region7: #{conv2d_batch_relu6.1} parent=0 // loop_footer_branch
    %8 = sbr.rel target = $region3
  $region8: #{conv2d_batch_relu6.1} parent=0 // loop_exit
    _

</llo_original>
